<compile_context>
chip_gen: v7x
topology: tpu7x:2x2x1
jax: 0.10.0
libtpu: 0.0.40
codegen_flags: <defaults>
</compile_context>

<pallas_src>
from math import factorial

import jax
import jax.numpy as jnp
from jax import lax
from jax.experimental import pallas as pl
from jax.experimental.pallas import tpu as pltpu


_C_PAD = 32      # lane-padded number of NER classes (4*_C_PAD = 128 lane slab)


# ----------------------------------------------------------------------------
# Pallas kernel 0: shared row-tiled matmul+bias  (time-parallel projections)
# ----------------------------------------------------------------------------
def _proj_bias_kernel(x_ref, w_ref, b_ref, o_ref):
    o_ref[...] = (jnp.dot(x_ref[...], w_ref[...],
                          preferred_element_type=jnp.float32)
                  + b_ref[...]).astype(o_ref.dtype)


def _pick_row_tile(rows, max_tile=512):
    for cand in (max_tile, 256, 128, 64, 32, 16, 8):
        if cand <= rows and rows % cand == 0:
            return cand
    return rows


def matmul_bias(x, w, b):
    """[rows, d] @ [d, n] + [1, n], tiled over rows (parallel grid)."""
    rows, d = x.shape
    n = w.shape[1]
    rt = _pick_row_tile(rows)
    return pl.pallas_call(
        _proj_bias_kernel,
        grid=(rows // rt,),
        out_shape=jax.ShapeDtypeStruct((rows, n), jnp.float32),
        in_specs=[pl.BlockSpec((rt, d), lambda i: (i, 0)),
                  pl.BlockSpec((d, n), lambda i: (0, 0)),
                  pl.BlockSpec((1, n), lambda i: (0, 0))],
        out_specs=pl.BlockSpec((rt, n), lambda i: (i, 0)),
        compiler_params=pltpu.CompilerParams(
            dimension_semantics=("parallel",)),
    )(x, w, b)


# ----------------------------------------------------------------------------
# Pallas kernel 1: bidirectional LSTM recurrence, streamed over T-chunks.
# Fused gate layout (8H columns): [i_f i_b | f_f f_b | o_f o_b | g_f g_b].
# fwd gate columns = even H-blocks (fed by gin at t_f), bwd = odd H-blocks
# (fed by gin at t_b); W_hh is block-diagonal in this permuted layout.
# ----------------------------------------------------------------------------
def _bilstm_rec_kernel(lens_ref, ginf_ref, ginb_ref, whh_ref,
                       outf_ref, outb_ref, hc_ref, cc_ref):
    TC, B, H8 = ginf_ref.shape
    H = H8 // 8
    H2 = 2 * H
    s = pl.program_id(0)
    nc = pl.num_programs(0)
    T = nc * TC

    @pl.when(s == 0)
    def _():
        hc_ref[...] = jnp.zeros_like(hc_ref)
        cc_ref[...] = jnp.zeros_like(cc_ref)

    # Hoisted loop invariants (no re-loading refs inside the unrolled loop).
    whh = whh_ref[...]                                           # [2H, 8H]
    lens = lens_ref[...]                                         # [B, 1] i32
    col8 = lax.broadcasted_iota(jnp.int32, (1, H8), 1)
    fwd_cols = ((col8 // H) % 2) == 0                            # [1, 8H] bool
    lane_fwd = lax.broadcasted_iota(jnp.int32, (1, H2), 1) < H   # [1, 2H] bool

    def step(local, carry):
        h_cat, c_cat = carry                                     # [B, 2H]
        t_f = s * TC + local
        t_b = T - 1 - t_f
        gin_f = ginf_ref[local]                                  # [B, 8H]
        gin_b = ginb_ref[TC - 1 - local]                         # [B, 8H]
        # One fused recurrent matmul for both directions (block-diag whh).
        rec = jnp.dot(h_cat, whh, preferred_element_type=jnp.float32)
        pre = jnp.where(fwd_cols, gin_f, gin_b) + rec            # [B, 8H]
        sig = jax.nn.sigmoid(pre[:, :6 * H])                     # [i|f|o] pairs
        g_cat = jnp.tanh(pre[:, 6 * H:])                         # [g_f g_b]
        i_cat = sig[:, 0:H2]
        f_cat = sig[:, H2:2 * H2]
        o_cat = sig[:, 2 * H2:3 * H2]
        c_new = f_cat * c_cat + i_cat * g_cat
        h_new = o_cat * jnp.tanh(c_new)                          # [h_f | h_b]
        m_f = t_f < lens                                         # [B, 1] bool
        m_b = t_b < lens
        # Packed-seq semantics: padded positions produce zeros.
        outf_ref[local] = jnp.where(m_f, h_new[:, :H], 0.0)
        outb_ref[TC - 1 - local] = jnp.where(m_b, h_new[:, H:], 0.0)
        # Single [B, 2H] select for the carries (fwd half / bwd half masks).
        m2 = jnp.where(lane_fwd, m_f, m_b)                       # [B, 2H] bool
        return (jnp.where(m2, h_new, h_cat), jnp.where(m2, c_new, c_cat))

    h_fin, c_fin = lax.fori_loop(0, TC, step, (hc_ref[...], cc_ref[...]),
                                 unroll=True)
    hc_ref[...] = h_fin
    cc_ref[...] = c_fin


def bilstm_forward(x_tbf, lengths, p, *, time_chunk=4):
    T, B, D = x_tbf.shape
    H = p["whh_f"].shape[0]
    TC = time_chunk
    assert T % TC == 0, "pad T to a multiple of time_chunk in the caller"
    nc = T // TC

    def split(w):  # torch gate order columns [i | f | g | o]
        return w[:, 0:H], w[:, H:2 * H], w[:, 2 * H:3 * H], w[:, 3 * H:4 * H]

    i_f, f_f, g_f, o_f = split(p["wih_f"])
    i_b, f_b, g_b, o_b = split(p["wih_b"])
    wih = jnp.concatenate([i_f, i_b, f_f, f_b, o_f, o_b, g_f, g_b], axis=1)
    bi_f, bf_f, bg_f, bo_f = split(p["b_f"])
    bi_b, bf_b, bg_b, bo_b = split(p["b_b"])
    bias = jnp.concatenate([bi_f, bi_b, bf_f, bf_b, bo_f, bo_b, bg_f, bg_b],
                           axis=1)
    ri_f, rf_f, rg_f, ro_f = split(p["whh_f"])
    ri_b, rf_b, rg_b, ro_b = split(p["whh_b"])
    whh = jnp.zeros((2 * H, 8 * H), jnp.float32)
    whh = whh.at[:H, 0 * H:1 * H].set(ri_f).at[H:, 1 * H:2 * H].set(ri_b)
    whh = whh.at[:H, 2 * H:3 * H].set(rf_f).at[H:, 3 * H:4 * H].set(rf_b)
    whh = whh.at[:H, 4 * H:5 * H].set(ro_f).at[H:, 5 * H:6 * H].set(ro_b)
    whh = whh.at[:H, 6 * H:7 * H].set(rg_f).at[H:, 7 * H:8 * H].set(rg_b)

    # Hoisted, time-parallel input projection (off the serial recurrence).
    gin = matmul_bias(x_tbf.reshape(T * B, D), wih, bias).reshape(T, B, 8 * H)
    lens2d = lengths.reshape(B, 1).astype(jnp.int32)

    out_f, out_b = pl.pallas_call(
        _bilstm_rec_kernel,
        grid=(nc,),
        out_shape=(jax.ShapeDtypeStruct((T, B, H), jnp.float32),
                   jax.ShapeDtypeStruct((T, B, H), jnp.float32)),
        in_specs=[pl.BlockSpec((B, 1), lambda s: (0, 0)),
                  pl.BlockSpec((TC, B, 8 * H), lambda s: (s, 0, 0)),
                  pl.BlockSpec((TC, B, 8 * H),
                               lambda s, _nc=nc: (_nc - 1 - s, 0, 0)),
                  pl.BlockSpec((2 * H, 8 * H), lambda s: (0, 0))],
        out_specs=(pl.BlockSpec((TC, B, H), lambda s: (s, 0, 0)),
                   pl.BlockSpec((TC, B, H),
                                lambda s, _nc=nc: (_nc - 1 - s, 0, 0))),
        scratch_shapes=[pltpu.VMEM((B, 2 * H), jnp.float32),   # h carry
                        pltpu.VMEM((B, 2 * H), jnp.float32)],  # c carry
        compiler_params=pltpu.CompilerParams(
            dimension_semantics=("arbitrary",)),
    )(lens2d, gin, gin, whh)
    return jnp.concatenate([out_f, out_b], axis=-1)              # [T, B, 2H]


# ----------------------------------------------------------------------------
# Pallas kernel 2: sequential NER decoder with one-hot label feedback,
# streamed over T-chunks.  Serial loop computes only logits -> argmax ->
# one-hot; softmax / pred / lane-dense [B,128] packing happen in a vectorized
# epilogue per chunk.  Slab lanes: [0:CP) logits | [CP:2CP) probs |
# [2CP:3CP) pred | [3CP:4CP) onehot.
# ----------------------------------------------------------------------------
def _ner_decoder_kernel(z1_ref, w1v_ref, w2_ref, b2_ref, out_ref,
                        lg_ref, oh_ref):
    TC, B, Hd = z1_ref.shape
    CP = w2_ref.shape[1]

    @pl.when(pl.program_id(0) == 0)
    def _():
        oh_ref[...] = jnp.zeros_like(oh_ref)

    # Hoisted loop invariants.
    w1v = w1v_ref[...]                                           # [CP, Hd]
    w2 = w2_ref[...]                                             # [Hd, CP]
    b2 = jnp.broadcast_to(b2_ref[...], (B, CP))
    col_ids = lax.broadcasted_iota(jnp.int32, (B, CP), 1)

    def body(local, v_prev):
        # one-hot feedback via a tiny MXU dot (vext slot, off the VPU path).
        v_contrib = jnp.dot(v_prev, w1v, preferred_element_type=jnp.float32)
        a1 = jnp.tanh(z1_ref[local] + v_contrib)
        logits = jnp.dot(a1, w2, preferred_element_type=jnp.float32) + b2
        lg_ref[local] = logits
        # argmax (first index on ties) -> one-hot carry; nothing else serial.
        m = jnp.max(logits, axis=-1, keepdims=True)
        idx = jnp.min(jnp.where(logits >= m, col_ids, CP),
                      axis=-1, keepdims=True)
        return (col_ids == idx).astype(jnp.float32)

    oh_ref[...] = lax.fori_loop(0, TC, body, oh_ref[...], unroll=True)

    # Vectorized epilogue (off the serial chain): softmax, pred, packing.
    logits_all = lg_ref[...].reshape(TC * B, CP)
    m = jnp.max(logits_all, axis=-1, keepdims=True)
    e = jnp.exp(logits_all - m)
    probs = e * pl.reciprocal(jnp.sum(e, axis=-1, keepdims=True), approx=True)
    cid = lax.broadcasted_iota(jnp.int32, (TC * B, CP), 1)
    idx = jnp.min(jnp.where(logits_all >= m, cid, CP), axis=-1, keepdims=True)
    onehot = (cid == idx).astype(jnp.float32)
    pred_b = jnp.broadcast_to(idx.astype(jnp.float32), (TC * B, CP))
    packed = jnp.concatenate([logits_all, probs, pred_b, onehot], axis=-1)
    out_ref[...] = packed.reshape(TC, B, 4 * CP)                 # lane-dense


def ner_decode(h_tbf, p, *, time_chunk=4):
    T, B, H2 = h_tbf.shape
    Hd = p["w1h"].shape[1]
    C = p["w2"].shape[1]
    CP = _C_PAD
    assert C <= CP
    TC = time_chunk
    assert T % TC == 0
    nc = T // TC

    # Hoisted, time-parallel projection: z1 = h @ W1h + b1 (shared kernel).
    z1 = matmul_bias(h_tbf.reshape(T * B, H2), p["w1h"],
                     p["b1"]).reshape(T, B, Hd)

    # Class-pad: zero W columns / W1v rows; -1e9 bias so pad classes never
    # win argmax and get ~zero probability (sliced off in the wrapper).
    w1v_pad = jnp.zeros((CP, Hd), jnp.float32).at[:C].set(p["w1v"])
    w2p = jnp.concatenate([p["w2"], jnp.zeros((Hd, CP - C), jnp.float32)],
                          axis=1)
    b2p = jnp.concatenate([p["b2"], jnp.full((1, CP - C), -1e9, jnp.float32)],
                          axis=1)

    slab = pl.pallas_call(
        _ner_decoder_kernel,
        grid=(nc,),
        out_shape=jax.ShapeDtypeStruct((T, B, 4 * CP), jnp.float32),
        in_specs=[pl.BlockSpec((TC, B, Hd), lambda s: (s, 0, 0)),
                  pl.BlockSpec((CP, Hd), lambda s: (0, 0)),
                  pl.BlockSpec((Hd, CP), lambda s: (0, 0)),
                  pl.BlockSpec((1, CP), lambda s: (0, 0))],
        out_specs=pl.BlockSpec((TC, B, 4 * CP), lambda s: (s, 0, 0)),
        scratch_shapes=[pltpu.VMEM((TC, B, CP), jnp.float32),    # chunk logits
                        pltpu.VMEM((B, CP), jnp.float32)],       # onehot carry
        compiler_params=pltpu.CompilerParams(
            dimension_semantics=("arbitrary",)),
    )(z1, w1v_pad, w2p, b2p)
    logits_t = slab[:, :, 0:C]                  # [T, B, C]
    probs_t = slab[:, :, CP:CP + C]             # [T, B, C]
    pred_t = slab[:, :, 2 * CP]                 # [T, B] (float labels)
    return logits_t, probs_t, pred_t


# ----------------------------------------------------------------------------
# Glue: losses + top-level forward matching LSTM_RE.forward (fallback branch)
# ----------------------------------------------------------------------------
def ce_sum_ignore(logits, targets, ignore_index=-1):
    """nn.CrossEntropyLoss(reduction='sum', ignore_index=-1)."""
    targets = targets.reshape(-1).astype(jnp.int32)
    logits = logits.reshape(targets.shape[0], -1)
    valid = targets != ignore_index
    t = jnp.where(valid, targets, 0)
    logz = jax.nn.logsumexp(logits, axis=-1)
    ll = jnp.take_along_axis(logits, t[:, None], axis=-1)[:, 0]
    return jnp.sum(jnp.where(valid, logz - ll, 0.0))


def lstm_re_forward(params, batch, num_relations, no_stance, *, time_chunk=4):
    word = batch["word_embs"]
    pos = batch["pos_embs"]
    B, T, _ = word.shape
    B_pad = max(8, ((B + 7) // 8) * 8)                 # sublane-full batch
    TC = time_chunk
    T_pad = ((T + TC - 1) // TC) * TC                  # chunk-divisible time

    # input_ac_seg = cat((token_embs, pos_embs), dim=2); dropout is identity
    # at inference.
    x = jnp.concatenate([word, pos], axis=-1).astype(jnp.float32)
    x_tbf = jnp.transpose(x, (1, 0, 2))                            # [T, B, D]
    x_tbf = jnp.pad(x_tbf, ((0, T_pad - T), (0, B_pad - B), (0, 0)))
    lens = jnp.pad(batch["lengths_tok"].astype(jnp.int32), (0, B_pad - B))

    # AC_Seg_Module: streamed BiLSTM + sequential NER decoder
    h_seg = bilstm_forward(x_tbf, lens, params["lstm"], time_chunk=TC)
    logits_t, probs_t, pred_t = ner_decode(h_seg, params["ner"], time_chunk=TC)

    logits_seg = jnp.transpose(logits_t[:T, :B], (1, 0, 2))        # [B, T, C]
    prob_seg = jnp.transpose(probs_t[:T, :B], (1, 0, 2))           # [B, T, C]
    pred_seg = jnp.transpose(pred_t[:T, :B], (1, 0))               # [B, T]

    # loss_seg: CE(sum, ignore_index=-1) over all tokens (pad already -1)
    loss_seg = ce_sum_ignore(logits_seg, batch["seg_ac"], ignore_index=-1)

    # TODO(synk): dgl graph build + TreeLSTM + regex pairing + pandas relation
    # post-processing have no Pallas equivalent; reproduce the
    # `if not rel_graphs:` fallback branch.
    rel = num_relations
    num_pairs = int(factorial(rel) // factorial(2) // factorial(rel - 2))
    stance_logits = jnp.zeros((num_pairs, rel),
                              jnp.float32).at[:, no_stance].set(100.0)
    stance_gt = jnp.ones((num_pairs,), jnp.int32)
    loss_stance = ce_sum_ignore(stance_logits, stance_gt, ignore_index=-1)

    pred_stance = jnp.ones_like(batch["stance"], dtype=jnp.float32) * -2.0
    pred_rel = jnp.ones_like(batch["stance"], dtype=jnp.float32) * -2.0

    loss_total = loss_seg + loss_stance
    return {
        "loss": {"total": loss_total},
        "preds": {"seg_ac": pred_seg, "relation": pred_rel, "stance": pred_stance},
        "probs": {"seg_ac": prob_seg},
    }


# ----------------------------------------------------------------------------
# Deterministic parameter init (shapes per LSTM_RE.__init__ / AC_Seg_Module).
# LSTM weights are [in, out] with torch gate-column order [i | f | g | o];
# b_* is the summed (b_ih + b_hh) bias per direction.
# ----------------------------------------------------------------------------
def init_params(key, token_dim, h_size, num_ac, ner_hidden):
    ks = jax.random.split(key, 11)
    u = lambda k, shape, s: jax.random.uniform(k, shape, jnp.float32, -s, s)
    s_l = 1.0 / float(h_size) ** 0.5
    lstm = dict(
        wih_f=u(ks[0], (token_dim, 4 * h_size), s_l),
        whh_f=u(ks[1], (h_size, 4 * h_size), s_l),
        b_f=u(ks[2], (1, 4 * h_size), s_l),
        wih_b=u(ks[3], (token_dim, 4 * h_size), s_l),
        whh_b=u(ks[4], (h_size, 4 * h_size), s_l),
        b_b=u(ks[5], (1, 4 * h_size), s_l),
    )
    ner_in = 2 * h_size + num_ac
    s1 = 1.0 / float(ner_in) ** 0.5
    s2 = 1.0 / float(ner_hidden) ** 0.5
    ner = dict(
        w1h=u(ks[6], (2 * h_size, ner_hidden), s1),
        w1v=u(ks[7], (num_ac, ner_hidden), s1),
        b1=u(ks[8], (1, ner_hidden), s1),
        w2=u(ks[9], (ner_hidden, num_ac), s2),
        b2=u(ks[10], (1, num_ac), s2),
    )
    return dict(lstm=lstm, ner=ner)


if __name__ == "__main__":
    # small, module-consistent shapes
    B, T = 2, 8
    WORD_D, POS_D = 24, 8                 # feature2dim['word_embs'/'pos_embs']
    H = 32                                # seq_lstm_h_size
    NER_HIDDEN = 32                       # ac_seg_hidden_size
    SEG_LABELS = ["O", "B-MC", "I-MC", "B-CL", "I-CL"]       # task2labels['seg_ac']
    STANCE_LABELS = ["None", "Support", "Attack"]            # task2labels['stance']
    NUM_AC = len(SEG_LABELS)
    NUM_REL = len(STANCE_LABELS)
    NO_STANCE = STANCE_LABELS.index("None")

    key = jax.random.PRNGKey(0)
    k_w, k_p, k_seg, k_st, k_par = jax.random.split(key, 5)

    lengths = jnp.array([T, T - 2], dtype=jnp.int32)         # lengths_tok
    tpos = jnp.arange(T)[None, :]
    token_mask = (tpos < lengths[:, None]).astype(jnp.int32)

    seg_ac = jax.random.randint(k_seg, (B, T), 0, NUM_AC).astype(jnp.int32)
    seg_ac = jnp.where(token_mask == 1, seg_ac, -1)          # batch.change_pad_value(-1)
    stance = jax.random.randint(k_st, (B, T), 0, NUM_REL).astype(jnp.int32)

    batch = {
        "word_embs": jax.random.normal(k_w, (B, T, WORD_D), jnp.float32),
        "pos_embs": jax.random.normal(k_p, (B, T, POS_D), jnp.float32),
        "lengths_tok": lengths,
        "token_mask": token_mask,
        "seg_ac": seg_ac,
        "stance": stance,
    }

    params = init_params(k_par, WORD_D + POS_D, H, NUM_AC, NER_HIDDEN)

    # time_chunk=4 -> 2 grid steps: exercises the streamed / reversed-chunk
    # bwd path even at toy T.
    out = lstm_re_forward(params, batch, NUM_REL, NO_STANCE, time_chunk=4)
    jax.block_until_ready(out["loss"]["total"])
    jax.block_until_ready(out["preds"]["seg_ac"])
    jax.block_until_ready(out["probs"]["seg_ac"])
    print("KERNEL_OK")
</pallas_src>

<mosaic_0001>
module attributes {stable_mosaic.version = 11 : i64} {
  func.func @_proj_bias_kernel(%arg0: i32, %arg1: memref<64x32xf32, #tpu.memory_space<vmem>>, %arg2: memref<32x256xf32, #tpu.memory_space<vmem>>, %arg3: memref<1x256xf32, #tpu.memory_space<vmem>>, %arg4: memref<64x256xf32, #tpu.memory_space<vmem>>) attributes {dimension_semantics = [#tpu.dimension_semantics<parallel>], iteration_bounds = array<i64: 1>, scalar_prefetch = 0 : i64, scratch_operands = 0 : i64, tpu.core_type = #tpu.core_type<tc>, window_params = [{transform_indices = @transform_0, window_bounds = array<i64: 64, 32>}, {pipeline_mode = #tpu.pipeline_mode<synchronous>, transform_indices = @transform_1, window_bounds = array<i64: 32, 256>}, {pipeline_mode = #tpu.pipeline_mode<synchronous>, transform_indices = @transform_2, window_bounds = array<i64: 1, 256>}, {transform_indices = @transform_3, window_bounds = array<i64: 64, 256>}]} {
    %c0 = arith.constant 0 : index
    %c0_0 = arith.constant 0 : index
    %0 = vector.load %arg1[%c0, %c0_0] : memref<64x32xf32, #tpu.memory_space<vmem>>, vector<64x32xf32>
    %c0_1 = arith.constant 0 : index
    %c0_2 = arith.constant 0 : index
    %1 = vector.load %arg2[%c0_1, %c0_2] : memref<32x256xf32, #tpu.memory_space<vmem>>, vector<32x256xf32>
    %cst = arith.constant dense<0.000000e+00> : vector<64x256xf32>
    %2 = tpu.matmul %0, %1, %cst {dimension_numbers = #tpu.dot_dimension_numbers<[1], [0], [0], [1], [0, 0, 1, 1], [], []>} : vector<64x32xf32>, vector<32x256xf32>, vector<64x256xf32> -> vector<64x256xf32>
    %c0_3 = arith.constant 0 : index
    %c0_4 = arith.constant 0 : index
    %3 = vector.load %arg3[%c0_3, %c0_4] : memref<1x256xf32, #tpu.memory_space<vmem>>, vector<1x256xf32>
    %4 = vector.broadcast %3 : vector<1x256xf32> to vector<64x256xf32>
    %5 = arith.addf %2, %4 : vector<64x256xf32>
    %c0_5 = arith.constant 0 : index
    %c0_6 = arith.constant 0 : index
    %6 = vector.load %arg4[%c0_5, %c0_6] : memref<64x256xf32, #tpu.memory_space<vmem>>, vector<64x256xf32>
    tpu.vector_store %arg4[%c0_5, %c0_6], %5 {strides = array<i32>} : memref<64x256xf32, #tpu.memory_space<vmem>>, vector<64x256xf32>,
    return
  }
  func.func @transform_0(%arg0: i32) -> (i32, i32) {
    %c0_i32 = arith.constant 0 : i32
    %c0_i32_0 = arith.constant 0 : i32
    return %arg0, %c0_i32 : i32, i32
  }
  func.func @transform_1(%arg0: i32) -> (i32, i32) {
    %c0_i32 = arith.constant 0 : i32
    %c0_i32_0 = arith.constant 0 : i32
    %c0_i32_1 = arith.constant 0 : i32
    return %c0_i32, %c0_i32_0 : i32, i32
  }
  func.func @transform_2(%arg0: i32) -> (i32, i32) {
    %c0_i32 = arith.constant 0 : i32
    %c0_i32_0 = arith.constant 0 : i32
    %c0_i32_1 = arith.constant 0 : i32
    return %c0_i32, %c0_i32_0 : i32, i32
  }
  func.func @transform_3(%arg0: i32) -> (i32, i32) {
    %c0_i32 = arith.constant 0 : i32
    %c0_i32_0 = arith.constant 0 : i32
    return %arg0, %c0_i32 : i32, i32
  }
}

</mosaic_0001>

<llo_original>
// kernel: tpu_custom_call.1
$region0: #{tpu_custom_call.1}
  #allocation0 [shape = 'u32[]', space=smem, size = 0x4, offset = 0x4, fixed_abs, tag = 'smem constant byte address 0x4 - core index']
  #allocation1 [shape = 'u32[144,128]{1,0:T(1,128)}', space=vmem, size = 0x12000, scoped, tag = 'internal scratch']
  %s0 = inlined_call_operand.vmem [shape: f32[64,32], index: 0, kind: input, shape index: {}]
  %s1 = inlined_call_operand.vmem [shape: f32[32,256], index: 1, kind: input, shape index: {}]
  %s2 = inlined_call_operand.vmem [shape: f32[1,256], index: 2, kind: input, shape index: {}]
  %s3 = inlined_call_operand.hbm [shape: f32[64,256], index: 3, kind: output, shape index: {}]
  %s4 = sld [smem:[#allocation0]]
  $region22: #{tpu_custom_call.1} parent=0
    _
  %s6 = ssub.s32 1, %s4
  %s7 = scalar_select 0, %s6, %s4
  $region1: #{tpu_custom_call.1} parent=0
    #allocation2 [shape = 'u8[65536]{0}', space=vmem, size = 0x10000, scoped, tag = 'output window, operand 0, single buffered']
    #allocation3 [shape = 's32[1]{0}', space=sflag, size = 0x4, scoped, tag = 'scoped memory for tpu_custom_call.1']
    %8 = vsyncpa [#allocation3], 0
    // Predicated region
    $region2: #{tpu_custom_call.1} parent=1 // pred_check
      _
    $region3: #{tpu_custom_call.1} parent=1 // pred_check_branch
      %10 = sbr.rel (0) target = $region5
    $region4: #{tpu_custom_call.1} parent=1 // pred_region
      _
    $region5: #{tpu_custom_call.1} parent=1 // pred_fallthru
      _
    // Predicated region
    $region6: #{tpu_custom_call.1} parent=1 // pred_check
      _
    $region7: #{tpu_custom_call.1} parent=1 // pred_check_branch
      %12 = sbr.rel (0) target = $region9
    $region8: #{tpu_custom_call.1} parent=1 // pred_region
      _
    $region9: #{tpu_custom_call.1} parent=1 // pred_fallthru
      _
    // Predicated region
    $region10: #{tpu_custom_call.1} parent=1 // pred_check
      _
    $region11: #{tpu_custom_call.1} parent=1 // pred_check_branch
      %14 = sbr.rel (0) target = $region13
    $region12: #{tpu_custom_call.1} parent=1 // pred_region
      _
    $region13: #{tpu_custom_call.1} parent=1 // pred_fallthru
      _
    %v15 = vld [vmem:[%s0] sm:$0xff]
    %v16 = vld [vmem:[%s0 + $0x8] sm:$0xff]
    %v17 = vld [vmem:[%s0 + $0x10] sm:$0xff]
    %v18 = vld [vmem:[%s0 + $0x18] sm:$0xff]
    %v19 = vld [vmem:[%s0 + $0x20] sm:$0xff]
    %v20 = vld [vmem:[%s0 + $0x28] sm:$0xff]
    %v21 = vld [vmem:[%s0 + $0x30] sm:$0xff]
    %v22 = vld [vmem:[%s0 + $0x38] sm:$0xff]
    %v23 = vld [vmem:[%s1] sm:$0xff]
    %v24 = vld [vmem:[%s1 + $0x8] sm:$0xff]
    %v25 = vld [vmem:[%s1 + $0x10] sm:$0xff]
    %v26 = vld [vmem:[%s1 + $0x18] sm:$0xff]
    %v27 = vld [vmem:[%s1 + $0x20] sm:$0xff]
    %v28 = vld [vmem:[%s1 + $0x28] sm:$0xff]
    %v29 = vld [vmem:[%s1 + $0x30] sm:$0xff]
    %v30 = vld [vmem:[%s1 + $0x38] sm:$0xff]
    %v31 = vld [vmem:[%s2] sm:$0x3]
    %v33 = vlaneseq
    %v34 = vshrl.u32 %v33, 7
    %v35 = vsub.s32 0, %v34
    %v36 = vrot.slane %v31, %v35
    %v37 = vlaneseq
    %v38 = vshrl.u32 %v37, 7
    %v39 = vsub.s32 1, %v38
    %v40 = vrot.slane %v31, %v39
    %vm43 = vcmask 261120
    %v45 = vsel %vm43, %v15, 0
    %v48 = vsel %vm43, %v16, 0
    %v51 = vsel %vm43, %v17, 0
    %v54 = vsel %vm43, %v18, 0
    %v57 = vsel %vm43, %v19, 0
    %v60 = vsel %vm43, %v20, 0
    %v63 = vsel %vm43, %v21, 0
    %v66 = vsel %vm43, %v22, 0
    %68 = vmatprep.subr.mxu0 %v24
    %69 = vmatpush1.msra.mxu0 %v23
    %70 = vmatprep.subr.mxu0 %v26
    %71 = vmatpush1.msra.mxu0 %v25
    %72 = vmatprep.subr.mxu0 %v28
    %73 = vmatpush1.msra.mxu0 %v27
    %74 = vmatprep.subr.mxu0 %v30
    %75 = vmatpush1.msra.mxu0 %v29
    %76 = vmatprep.subr.mxu0 0.0
    %77 = vmatpush1.msra.mxu0 0.0
    %78 = vmatprep.subr.mxu0 0.0
    %79 = vmatpush1.msra.mxu0 0.0
    %80 = vmatprep.subr.mxu0 0.0
    %81 = vmatpush1.msra.mxu0 0.0
    %82 = vmatprep.subr.mxu0 0.0
    %83 = vmatpush1.msra.mxu0 0.0
    %84 = vmatprep.subr.mxu0 0.0
    %85 = vmatpush1.msra.mxu0 0.0
    %86 = vmatprep.subr.mxu0 0.0
    %87 = vmatpush1.msra.mxu0 0.0
    %88 = vmatprep.subr.mxu0 0.0
    %89 = vmatpush1.msra.mxu0 0.0
    %90 = vmatprep.subr.mxu0 0.0
    %91 = vmatpush1.msra.mxu0 0.0
    %92 = vmatprep.subr.mxu0 0.0
    %93 = vmatpush1.msra.mxu0 0.0
    %94 = vmatprep.subr.mxu0 0.0
    %95 = vmatpush1.msra.mxu0 0.0
    %96 = vmatprep.subr.mxu0 0.0
    %97 = vmatpush1.msra.mxu0 0.0
    %98 = vmatprep.subr.mxu0 0.0
    %99 = vmatpush1.msra.mxu0 0.0
    %100 = vmatprep.subr.mxu0 0.0
    %101 = vmatpush1.msra.mxu0 0.0
    %102 = vmatprep.subr.mxu0 0.0
    %103 = vmatpush1.msra.mxu0 0.0
    %104 = vmatprep.subr.mxu0 0.0
    %105 = vmatpush1.msra.mxu0 0.0
    %106 = vmatprep.subr.mxu0 0.0
    %107 = vmatpush1.msra.mxu0 0.0
    %108 = vmatprep.subr.mxu0 0.0
    %109 = vmatpush1.msra.mxu0 0.0
    %110 = vmatprep.subr.mxu0 0.0
    %111 = vmatpush1.msra.mxu0 0.0
    %112 = vmatprep.subr.mxu0 0.0
    %113 = vmatpush1.msra.mxu0 0.0
    %114 = vmatprep.subr.mxu0 0.0
    %115 = vmatpush1.msra.mxu0 0.0
    %116 = vmatprep.subr.mxu0 0.0
    %117 = vmatpush1.msra.mxu0 0.0
    %118 = vmatprep.subr.mxu0 0.0
    %119 = vmatpush1.msra.mxu0 0.0
    %120 = vmatprep.subr.mxu0 0.0
    %121 = vmatpush1.msra.mxu0 0.0
    %122 = vmatprep.subr.mxu0 0.0
    %123 = vmatpush1.msra.mxu0 0.0
    %124 = vmatprep.subr.mxu0 0.0
    %125 = vmatpush1.msra.mxu0 0.0
    %126 = vmatprep.subr.mxu0 0.0
    %127 = vmatpush1.msra.mxu0 0.0
    %128 = vmatprep.subr.mxu0 0.0
    %129 = vmatpush1.msra.mxu0 0.0
    %130 = vmatprep.subr.mxu0 0.0
    %131 = vmatpush1.msra.mxu0 0.0
    %132 = vmatprep.mubr.f32.mxu0 0.0
    %133 = vmatmul.mubr.f32.gmra.mrb[0].mxu0 %v45
    %v134 = vpop.f32.mrb[0].mxu0
    %v135 = vadd.f32 %v36, %v134
    %v136 = vpop.f32.mrb[0].mxu0
    %v137 = vadd.f32 %v40, %v136
    %138 = vmatprep.mubr.f32.mxu0 0.0
    %139 = vmatmul.mubr.f32.gmra.mrb[0].mxu0 %v48
    %v140 = vpop.f32.mrb[0].mxu0
    %v141 = vadd.f32 %v36, %v140
    %v142 = vpop.f32.mrb[0].mxu0
    %v143 = vadd.f32 %v40, %v142
    %144 = vmatprep.mubr.f32.mxu0 0.0
    %145 = vmatmul.mubr.f32.gmra.mrb[0].mxu0 %v51
    %v146 = vpop.f32.mrb[0].mxu0
    %v147 = vadd.f32 %v36, %v146
    %v148 = vpop.f32.mrb[0].mxu0
    %v149 = vadd.f32 %v40, %v148
    %150 = vmatprep.mubr.f32.mxu0 0.0
    %151 = vmatmul.mubr.f32.gmra.mrb[0].mxu0 %v54
    %v152 = vpop.f32.mrb[0].mxu0
    %v153 = vadd.f32 %v36, %v152
    %v154 = vpop.f32.mrb[0].mxu0
    %v155 = vadd.f32 %v40, %v154
    %156 = vmatprep.mubr.f32.mxu0 0.0
    %157 = vmatmul.mubr.f32.gmra.mrb[0].mxu0 %v57
    %v158 = vpop.f32.mrb[0].mxu0
    %v159 = vadd.f32 %v36, %v158
    %v160 = vpop.f32.mrb[0].mxu0
    %v161 = vadd.f32 %v40, %v160
    %162 = vmatprep.mubr.f32.mxu0 0.0
    %163 = vmatmul.mubr.f32.gmra.mrb[0].mxu0 %v60
    %v164 = vpop.f32.mrb[0].mxu0
    %v165 = vadd.f32 %v36, %v164
    %v166 = vpop.f32.mrb[0].mxu0
    %v167 = vadd.f32 %v40, %v166
    %168 = vmatprep.mubr.f32.mxu0 0.0
    %169 = vmatmul.mubr.f32.gmra.mrb[0].mxu0 %v63
    %v170 = vpop.f32.mrb[0].mxu0
    %v171 = vadd.f32 %v36, %v170
    %v172 = vpop.f32.mrb[0].mxu0
    %v173 = vadd.f32 %v40, %v172
    %174 = vmatprep.mubr.f32.mxu0 0.0
    %175 = vmatmul.mubr.f32.gmra.mrb[0].mxu0 %v66
    %v176 = vpop.f32.mrb[0].mxu0
    %v177 = vadd.f32 %v36, %v176
    %v178 = vpop.f32.mrb[0].mxu0
    %v179 = vadd.f32 %v40, %v178
    %180 = vdwg.mxu0
    %181 = vst [vmem:[#allocation2] sm:$0xff] %v135
    %182 = vst [vmem:[#allocation2 + $0x8] sm:$0xff] %v137
    %183 = vst [vmem:[#allocation2 + $0x10] sm:$0xff] %v141
    %184 = vst [vmem:[#allocation2 + $0x18] sm:$0xff] %v143
    %185 = vst [vmem:[#allocation2 + $0x20] sm:$0xff] %v147
    %186 = vst [vmem:[#allocation2 + $0x28] sm:$0xff] %v149
    %187 = vst [vmem:[#allocation2 + $0x30] sm:$0xff] %v153
    %188 = vst [vmem:[#allocation2 + $0x38] sm:$0xff] %v155
    %189 = vst [vmem:[#allocation2 + $0x40] sm:$0xff] %v159
    %190 = vst [vmem:[#allocation2 + $0x48] sm:$0xff] %v161
    %191 = vst [vmem:[#allocation2 + $0x50] sm:$0xff] %v165
    %192 = vst [vmem:[#allocation2 + $0x58] sm:$0xff] %v167
    %193 = vst [vmem:[#allocation2 + $0x60] sm:$0xff] %v171
    %194 = vst [vmem:[#allocation2 + $0x68] sm:$0xff] %v173
    %195 = vst [vmem:[#allocation2 + $0x70] sm:$0xff] %v177
    %196 = vst [vmem:[#allocation2 + $0x78] sm:$0xff] %v179
    // Predicated region
    $region14: #{tpu_custom_call.1} parent=1 // pred_check
      _
    $region15: #{tpu_custom_call.1} parent=1 // pred_check_branch
      %198 = sbr.rel (0) target = $region17
    $region16: #{tpu_custom_call.1} parent=1 // pred_region
      %s200 = ssub.s32 2048, 2048
      %201 = vsyncadd [#allocation3], %s200
      %s202 = sshll.u32 [#allocation2], 4
      %s203 = int_to_ptr.vmem [resolvable:$true] %s202
      %208 = dma.vmem_to_hbm [thread:$0]  %s203, 2048, %s3, [#allocation3], 256, 256, 16
    $region17: #{tpu_custom_call.1} parent=1 // pred_fallthru
      _
    // Predicated region
    $region18: #{tpu_custom_call.1} parent=1 // pred_check
      _
    $region19: #{tpu_custom_call.1} parent=1 // pred_check_branch
      %210 = sbr.rel (0) target = $region21
    $region20: #{tpu_custom_call.1} parent=1 // pred_region
      %211 = dma.done [#allocation3], 2048
    $region21: #{tpu_custom_call.1} parent=1 // pred_fallthru
      _
    %212 = vsyncpa [#allocation3], 1

</llo_original>
